<compile_context>
chip_gen: v7x
topology: tpu7x:2x2x1
jax: 0.10.0
libtpu: 0.0.40
codegen_flags: <defaults>
</compile_context>

<pallas_src>
import jax
import jax.numpy as jnp
from jax.experimental import pallas as pl
from jax.experimental.pallas import tpu as pltpu


def _se3_kernel(t_ref, x_ref, o_ref):
    # t_ref: (M, K, TB), x_ref: (K, N, TB), o_ref: (M, N, TB).  TB on lanes.
    t = t_ref[...].astype(jnp.float32)
    x = x_ref[...].astype(jnp.float32)
    k_dim = t_ref.shape[1]

    # Unrolled VPU multiply-accumulate over the static, tiny K axis
    # (K = 4 for SE(3) homogeneous transforms).  Accumulate in float32.
    acc = t[:, 0, :][:, None, :] * x[0, :, :][None, :, :]        # (M, N, TB)
    for k in range(1, k_dim):
        acc = acc + t[:, k, :][:, None, :] * x[k, :, :][None, :, :]

    o_ref[...] = acc.astype(o_ref.dtype)


def se3_apply(T, target):
    """Batched matmul  T @ target  via a Pallas TPU kernel.

    T:      (B, M, K)
    target: (B, K, N)
    returns (B, M, N)   (same semantics as torch batched `@`)
    """
    B, M, K = T.shape
    Bx, Kx, N = target.shape
    assert B == Bx and K == Kx

    out_dtype = jnp.result_type(T.dtype, target.dtype)
    itemsize = jnp.dtype(out_dtype).itemsize
    per_elem_bytes = (M * K + K * N + M * N) * itemsize

    # Lane-dense batch tile (multiple of 128); keep the three blocks for one
    # grid step at <= ~4 MiB so the double-buffered working set stays far
    # under the scoped-VMEM limit on every generation (incl. v7x's 64 MiB TC),
    # while still being large enough to amortize per-step overhead and hit
    # streaming HBM bandwidth.
    tb = 8192
    while tb > 128 and tb * per_elem_bytes > (4 << 20):
        tb //= 2

    if B <= tb:
        # One block covers the whole batch; block last-dim == array dim, so
        # the (8, 128) block-shape constraint does not apply.
        tb = B
        b_pad = B
    else:
        b_pad = pl.cdiv(B, tb) * tb

    # Put the batch on the fast (128-lane) axis; transposes live in the
    # wrapper (plain XLA), the kernel only sees lane-dense slabs.
    t_l = jnp.transpose(T, (1, 2, 0))        # (M, K, B)
    x_l = jnp.transpose(target, (1, 2, 0))   # (K, N, B)
    if b_pad != B:
        pad = ((0, 0), (0, 0), (0, b_pad - B))
        t_l = jnp.pad(t_l, pad)
        x_l = jnp.pad(x_l, pad)

    out_l = pl.pallas_call(
        _se3_kernel,
        out_shape=jax.ShapeDtypeStruct((M, N, b_pad), out_dtype),
        grid_spec=pl.GridSpec(
            grid=(b_pad // tb,),
            in_specs=[
                pl.BlockSpec((M, K, tb), lambda b: (0, 0, b)),
                pl.BlockSpec((K, N, tb), lambda b: (0, 0, b)),
            ],
            out_specs=pl.BlockSpec((M, N, tb), lambda b: (0, 0, b)),
        ),
        compiler_params=pltpu.CompilerParams(
            # Batch tiles are independent -> megacore-shardable on v7x.
            dimension_semantics=("parallel",),
            # Explicit, generation-safe budget (blocks are capped well below).
            vmem_limit_bytes=32 * 1024 * 1024,
        ),
    )(t_l, x_l)

    out = jnp.transpose(out_l, (2, 0, 1))    # (b_pad, M, N)
    if b_pad != B:
        out = out[:B]
    return out


if __name__ == "__main__":
    key = jax.random.PRNGKey(0)

    # Small SE(3)-style case: batch of 4x4 transforms applied to 8 points.
    k1, k2, k3, k4 = jax.random.split(key, 4)
    B, M, K, N = 2, 4, 4, 8
    T = jax.random.normal(k1, (B, M, K), dtype=jnp.float32)
    target = jax.random.normal(k2, (B, K, N), dtype=jnp.float32)

    out = se3_apply(T, target)
    out = jax.block_until_ready(out)
    ref = jnp.matmul(T, target)
    assert out.shape == (B, M, N)
    assert jnp.allclose(out, ref, atol=1e-5, rtol=1e-5)

    # Larger batch to exercise the lane-dense batch tiling path.
    B2 = 2304
    T2 = jax.random.normal(k3, (B2, M, K), dtype=jnp.float32)
    tgt2 = jax.random.normal(k4, (B2, K, N), dtype=jnp.float32)
    out2 = jax.block_until_ready(se3_apply(T2, tgt2))
    ref2 = jnp.matmul(T2, tgt2)
    assert out2.shape == (B2, M, N)
    assert jnp.allclose(out2, ref2, atol=1e-5, rtol=1e-5)

    # Very large batch: forces multiple grid steps plus a padded tail block.
    B3 = 20000  # > tile (8192) and not a multiple of it -> pad + 3 grid steps
    k5, k6 = jax.random.split(k4)
    T3 = jax.random.normal(k5, (B3, M, K), dtype=jnp.float32)
    tgt3 = jax.random.normal(k6, (B3, K, N), dtype=jnp.float32)
    out3 = jax.block_until_ready(se3_apply(T3, tgt3))
    ref3 = jnp.matmul(T3, tgt3)
    assert out3.shape == (B3, M, N)
    assert jnp.allclose(out3, ref3, atol=1e-5, rtol=1e-5)

    print("KERNEL_OK")
</pallas_src>

<mosaic_0001>
module attributes {stable_mosaic.version = 11 : i64} {
  func.func @_se3_kernel(%arg0: i32, %arg1: memref<4x4x2xf32, #tpu.memory_space<vmem>>, %arg2: memref<4x8x2xf32, #tpu.memory_space<vmem>>, %arg3: memref<4x8x2xf32, #tpu.memory_space<vmem>>) attributes {dimension_semantics = [#tpu.dimension_semantics<parallel>], iteration_bounds = array<i64: 1>, scalar_prefetch = 0 : i64, scratch_operands = 0 : i64, tpu.core_type = #tpu.core_type<tc>, window_params = [{transform_indices = @transform_0, window_bounds = array<i64: 4, 4, 2>}, {transform_indices = @transform_1, window_bounds = array<i64: 4, 8, 2>}, {transform_indices = @transform_2, window_bounds = array<i64: 4, 8, 2>}]} {
    %c0 = arith.constant 0 : index
    %c0_0 = arith.constant 0 : index
    %c0_1 = arith.constant 0 : index
    %0 = vector.load %arg1[%c0, %c0_0, %c0_1] : memref<4x4x2xf32, #tpu.memory_space<vmem>>, vector<4x4x2xf32>
    %c0_2 = arith.constant 0 : index
    %c0_3 = arith.constant 0 : index
    %c0_4 = arith.constant 0 : index
    %1 = vector.load %arg2[%c0_2, %c0_3, %c0_4] : memref<4x8x2xf32, #tpu.memory_space<vmem>>, vector<4x8x2xf32>
    %2 = vector.extract_strided_slice %0 {offsets = [0, 0, 0], sizes = [4, 1, 2], strides = [1, 1, 1]} : vector<4x4x2xf32> to vector<4x1x2xf32>
    %3 = vector.shape_cast %2 : vector<4x1x2xf32> to vector<4x2xf32>
    %4 = vector.shape_cast %3 : vector<4x2xf32> to vector<4x1x2xf32>
    %5 = vector.extract_strided_slice %1 {offsets = [0, 0, 0], sizes = [1, 8, 2], strides = [1, 1, 1]} : vector<4x8x2xf32> to vector<1x8x2xf32>
    %6 = vector.shape_cast %5 : vector<1x8x2xf32> to vector<8x2xf32>
    %7 = vector.shape_cast %6 : vector<8x2xf32> to vector<1x8x2xf32>
    %8 = vector.broadcast %4 : vector<4x1x2xf32> to vector<4x8x2xf32>
    %9 = vector.broadcast %7 : vector<1x8x2xf32> to vector<4x8x2xf32>
    %10 = arith.mulf %8, %9 : vector<4x8x2xf32>
    %11 = vector.extract_strided_slice %0 {offsets = [0, 1, 0], sizes = [4, 1, 2], strides = [1, 1, 1]} : vector<4x4x2xf32> to vector<4x1x2xf32>
    %12 = vector.shape_cast %11 : vector<4x1x2xf32> to vector<4x2xf32>
    %13 = vector.shape_cast %12 : vector<4x2xf32> to vector<4x1x2xf32>
    %14 = vector.extract_strided_slice %1 {offsets = [1, 0, 0], sizes = [1, 8, 2], strides = [1, 1, 1]} : vector<4x8x2xf32> to vector<1x8x2xf32>
    %15 = vector.shape_cast %14 : vector<1x8x2xf32> to vector<8x2xf32>
    %16 = vector.shape_cast %15 : vector<8x2xf32> to vector<1x8x2xf32>
    %17 = vector.broadcast %13 : vector<4x1x2xf32> to vector<4x8x2xf32>
    %18 = vector.broadcast %16 : vector<1x8x2xf32> to vector<4x8x2xf32>
    %19 = arith.mulf %17, %18 : vector<4x8x2xf32>
    %20 = arith.addf %10, %19 : vector<4x8x2xf32>
    %21 = vector.extract_strided_slice %0 {offsets = [0, 2, 0], sizes = [4, 1, 2], strides = [1, 1, 1]} : vector<4x4x2xf32> to vector<4x1x2xf32>
    %22 = vector.shape_cast %21 : vector<4x1x2xf32> to vector<4x2xf32>
    %23 = vector.shape_cast %22 : vector<4x2xf32> to vector<4x1x2xf32>
    %24 = vector.extract_strided_slice %1 {offsets = [2, 0, 0], sizes = [1, 8, 2], strides = [1, 1, 1]} : vector<4x8x2xf32> to vector<1x8x2xf32>
    %25 = vector.shape_cast %24 : vector<1x8x2xf32> to vector<8x2xf32>
    %26 = vector.shape_cast %25 : vector<8x2xf32> to vector<1x8x2xf32>
    %27 = vector.broadcast %23 : vector<4x1x2xf32> to vector<4x8x2xf32>
    %28 = vector.broadcast %26 : vector<1x8x2xf32> to vector<4x8x2xf32>
    %29 = arith.mulf %27, %28 : vector<4x8x2xf32>
    %30 = arith.addf %20, %29 : vector<4x8x2xf32>
    %31 = vector.extract_strided_slice %0 {offsets = [0, 3, 0], sizes = [4, 1, 2], strides = [1, 1, 1]} : vector<4x4x2xf32> to vector<4x1x2xf32>
    %32 = vector.shape_cast %31 : vector<4x1x2xf32> to vector<4x2xf32>
    %33 = vector.shape_cast %32 : vector<4x2xf32> to vector<4x1x2xf32>
    %34 = vector.extract_strided_slice %1 {offsets = [3, 0, 0], sizes = [1, 8, 2], strides = [1, 1, 1]} : vector<4x8x2xf32> to vector<1x8x2xf32>
    %35 = vector.shape_cast %34 : vector<1x8x2xf32> to vector<8x2xf32>
    %36 = vector.shape_cast %35 : vector<8x2xf32> to vector<1x8x2xf32>
    %37 = vector.broadcast %33 : vector<4x1x2xf32> to vector<4x8x2xf32>
    %38 = vector.broadcast %36 : vector<1x8x2xf32> to vector<4x8x2xf32>
    %39 = arith.mulf %37, %38 : vector<4x8x2xf32>
    %40 = arith.addf %30, %39 : vector<4x8x2xf32>
    %c0_5 = arith.constant 0 : index
    %c0_6 = arith.constant 0 : index
    %c0_7 = arith.constant 0 : index
    %41 = vector.load %arg3[%c0_5, %c0_6, %c0_7] : memref<4x8x2xf32, #tpu.memory_space<vmem>>, vector<4x8x2xf32>
    tpu.vector_store %arg3[%c0_5, %c0_6, %c0_7], %40 {strides = array<i32>} : memref<4x8x2xf32, #tpu.memory_space<vmem>>, vector<4x8x2xf32>,
    return
  }
  func.func @transform_0(%arg0: i32) -> (i32, i32, i32) {
    %c0_i32 = arith.constant 0 : i32
    %c0_i32_0 = arith.constant 0 : i32
    %c0_i32_1 = arith.constant 0 : i32
    return %c0_i32, %c0_i32_0, %arg0 : i32, i32, i32
  }
  func.func @transform_1(%arg0: i32) -> (i32, i32, i32) {
    %c0_i32 = arith.constant 0 : i32
    %c0_i32_0 = arith.constant 0 : i32
    %c0_i32_1 = arith.constant 0 : i32
    return %c0_i32, %c0_i32_0, %arg0 : i32, i32, i32
  }
  func.func @transform_2(%arg0: i32) -> (i32, i32, i32) {
    %c0_i32 = arith.constant 0 : i32
    %c0_i32_0 = arith.constant 0 : i32
    %c0_i32_1 = arith.constant 0 : i32
    return %c0_i32, %c0_i32_0, %arg0 : i32, i32, i32
  }
}

</mosaic_0001>

<llo_original>
// kernel: tpu_custom_call.1
$region0: #{tpu_custom_call.1}
  #allocation0 [shape = 'u32[]', space=smem, size = 0x4, offset = 0x4, fixed_abs, tag = 'smem constant byte address 0x4 - core index']
  #allocation1 [shape = 'u32[144,128]{1,0:T(1,128)}', space=vmem, size = 0x12000, scoped, tag = 'internal scratch']
  %s0 = inlined_call_operand.vmem [shape: f32[4,4,2], index: 0, kind: input, shape index: {}]
  %s1 = inlined_call_operand.vmem [shape: f32[4,8,2], index: 1, kind: input, shape index: {}]
  %s2 = inlined_call_operand.vmem [shape: f32[4,8,2], index: 2, kind: output, shape index: {}]
  %s3 = sld [smem:[#allocation0]]
  $region18: #{tpu_custom_call.1} parent=0
    _
  %s5 = ssub.s32 1, %s3
  %s6 = scalar_select 0, %s5, %s3
  // Predicated region
  $region2: #{tpu_custom_call.1} parent=0 // pred_check
    _
  $region3: #{tpu_custom_call.1} parent=0 // pred_check_branch
    %8 = sbr.rel (0) target = $region5
  $region4: #{tpu_custom_call.1} parent=0 // pred_region
    _
  $region5: #{tpu_custom_call.1} parent=0 // pred_fallthru
    _
  // Predicated region
  $region6: #{tpu_custom_call.1} parent=0 // pred_check
    _
  $region7: #{tpu_custom_call.1} parent=0 // pred_check_branch
    %10 = sbr.rel (0) target = $region9
  $region8: #{tpu_custom_call.1} parent=0 // pred_region
    _
  $region9: #{tpu_custom_call.1} parent=0 // pred_fallthru
    _
  %v11 = vld [vmem:[%s0] sm:$0xf]
  %v12 = vld [vmem:[%s0 + $0x4] sm:$0xf]
  %v13 = vld [vmem:[%s0 + $0x8] sm:$0xf]
  %v14 = vld [vmem:[%s0 + $0xc] sm:$0xf]
  %v15 = vld [vmem:[%s1] sm:$0xff]
  %v16 = vld [vmem:[%s1 + $0x8] sm:$0xff]
  %v17 = vld [vmem:[%s1 + $0x10] sm:$0xff]
  %v18 = vld [vmem:[%s1 + $0x18] sm:$0xff]
  %v19 = vlaneseq
  %v20 = vshrl.u32 %v19, 7
  %v21 = vsub.s32 0, %v20
  %v22 = vrot.slane %v11, %v21
  %v23 = vlaneseq
  %v24 = vshrl.u32 %v23, 7
  %v25 = vsub.s32 0, %v24
  %v26 = vrot.slane %v12, %v25
  %v27 = vlaneseq
  %v28 = vshrl.u32 %v27, 7
  %v29 = vsub.s32 0, %v28
  %v30 = vrot.slane %v13, %v29
  %v31 = vlaneseq
  %v32 = vshrl.u32 %v31, 7
  %v33 = vsub.s32 0, %v32
  %v34 = vrot.slane %v14, %v33
  %v35 = vmul.f32 %v22, %v15
  %v36 = vmul.f32 %v26, %v15
  %v37 = vmul.f32 %v30, %v15
  %v38 = vmul.f32 %v34, %v15
  %v39 = vlaneseq
  %v40 = vshrl.u32 %v39, 7
  %v41 = vsub.s32 1, %v40
  %v42 = vrot.slane %v11, %v41
  %v43 = vlaneseq
  %v44 = vshrl.u32 %v43, 7
  %v45 = vsub.s32 1, %v44
  %v46 = vrot.slane %v12, %v45
  %v47 = vlaneseq
  %v48 = vshrl.u32 %v47, 7
  %v49 = vsub.s32 1, %v48
  %v50 = vrot.slane %v13, %v49
  %v51 = vlaneseq
  %v52 = vshrl.u32 %v51, 7
  %v53 = vsub.s32 1, %v52
  %v54 = vrot.slane %v14, %v53
  %v55 = vmul.f32 %v42, %v16
  %v56 = vmul.f32 %v46, %v16
  %v57 = vmul.f32 %v50, %v16
  %v58 = vmul.f32 %v54, %v16
  %v59 = vadd.f32 %v35, %v55
  %v60 = vadd.f32 %v36, %v56
  %v61 = vadd.f32 %v37, %v57
  %v62 = vadd.f32 %v38, %v58
  %v63 = vlaneseq
  %v64 = vshrl.u32 %v63, 7
  %v65 = vsub.s32 2, %v64
  %v66 = vrot.slane %v11, %v65
  %v67 = vlaneseq
  %v68 = vshrl.u32 %v67, 7
  %v69 = vsub.s32 2, %v68
  %v70 = vrot.slane %v12, %v69
  %v71 = vlaneseq
  %v72 = vshrl.u32 %v71, 7
  %v73 = vsub.s32 2, %v72
  %v74 = vrot.slane %v13, %v73
  %v75 = vlaneseq
  %v76 = vshrl.u32 %v75, 7
  %v77 = vsub.s32 2, %v76
  %v78 = vrot.slane %v14, %v77
  %v79 = vmul.f32 %v66, %v17
  %v80 = vmul.f32 %v70, %v17
  %v81 = vmul.f32 %v74, %v17
  %v82 = vmul.f32 %v78, %v17
  %v83 = vadd.f32 %v59, %v79
  %v84 = vadd.f32 %v60, %v80
  %v85 = vadd.f32 %v61, %v81
  %v86 = vadd.f32 %v62, %v82
  %v87 = vlaneseq
  %v88 = vshrl.u32 %v87, 7
  %v89 = vsub.s32 3, %v88
  %v90 = vrot.slane %v11, %v89
  %v91 = vlaneseq
  %v92 = vshrl.u32 %v91, 7
  %v93 = vsub.s32 3, %v92
  %v94 = vrot.slane %v12, %v93
  %v95 = vlaneseq
  %v96 = vshrl.u32 %v95, 7
  %v97 = vsub.s32 3, %v96
  %v98 = vrot.slane %v13, %v97
  %v99 = vlaneseq
  %v100 = vshrl.u32 %v99, 7
  %v101 = vsub.s32 3, %v100
  %v102 = vrot.slane %v14, %v101
  %v103 = vmul.f32 %v90, %v18
  %v104 = vmul.f32 %v94, %v18
  %v105 = vmul.f32 %v98, %v18
  %v106 = vmul.f32 %v102, %v18
  %v107 = vadd.f32 %v83, %v103
  %v108 = vadd.f32 %v84, %v104
  %v109 = vadd.f32 %v85, %v105
  %v110 = vadd.f32 %v86, %v106
  %vm111 = vcmask 15360
  %112 = vst.msk [vmem:[%s2] sm:$0xff] %vm111, %v107
  %113 = vst.msk [vmem:[%s2 + $0x8] sm:$0xff] %vm111, %v108
  %114 = vst.msk [vmem:[%s2 + $0x10] sm:$0xff] %vm111, %v109
  %115 = vst.msk [vmem:[%s2 + $0x18] sm:$0xff] %vm111, %v110
  // Predicated region
  $region10: #{tpu_custom_call.1} parent=0 // pred_check
    _
  $region11: #{tpu_custom_call.1} parent=0 // pred_check_branch
    %117 = sbr.rel (0) target = $region13
  $region12: #{tpu_custom_call.1} parent=0 // pred_region
    _
  $region13: #{tpu_custom_call.1} parent=0 // pred_fallthru
    _
  // Predicated region
  $region14: #{tpu_custom_call.1} parent=0 // pred_check
    _
  $region15: #{tpu_custom_call.1} parent=0 // pred_check_branch
    %119 = sbr.rel (0) target = $region17
  $region16: #{tpu_custom_call.1} parent=0 // pred_region
    _
  $region17: #{tpu_custom_call.1} parent=0 // pred_fallthru
    _

</llo_original>
